<compile_context>
chip_gen: v5e
topology: v5e:2x2
jax: 0.10.0
libtpu: 0.0.40
codegen_flags: <defaults>
</compile_context>

<pallas_src>
import functools

import jax
import jax.numpy as jnp
from jax import lax
from jax.experimental import pallas as pl
from jax.experimental.pallas import tpu as pltpu

_LANE_WIDTH = 1024      # lane-dense last dim (multiple of 128) -> wide unmasked stores
_MAX_TILE_ROWS = 512    # 512 x 1024 x 4 B = 2 MiB per f32 buffer (8 MiB total w/ double-buffered in+out)

# murmur3 fmix32 constants expressed as signed 32-bit values (all kernel math is int32, wrapping).
_GOLDEN = -1640531527    # 0x9E3779B9
_FMIX_C1 = -2048144789   # 0x85EBCA6B
_FMIX_C2 = -1028477387   # 0xC2B2AE35


def _round_up(a, b):
    return -(-a // b) * b


def _fmix32(h):
    """murmur3 finalizer: well-mixed 32 random bits from a counter (int32, wrapping)."""
    # TODO(synk): a 2-round xorshift-multiply finalizer would save ~4 more VALU ops/elem
    # on VALU-bound configs (v7x / bf16) at a small statistical-quality cost.
    h = h ^ lax.shift_right_logical(h, jnp.int32(16))
    h = h * jnp.int32(_FMIX_C1)
    h = h ^ lax.shift_right_logical(h, jnp.int32(13))
    h = h * jnp.int32(_FMIX_C2)
    h = h ^ lax.shift_right_logical(h, jnp.int32(16))
    return h


def _salt_pepper_kernel(seed_ref, x_ref, o_ref, *, thr_flip24, thr_salt8):
    tile_rows, width = x_ref.shape

    # Fold all scalar terms (tile offset, seed mix) into one scalar-unit value.
    base = pl.program_id(0) * (tile_rows * width) + seed_ref[0] * jnp.int32(_GOLDEN)

    # Global element index of every lane of this tile (flattened layout, int32).
    row = lax.broadcasted_iota(jnp.int32, (tile_rows, width), 0)
    col = lax.broadcasted_iota(jnp.int32, (tile_rows, width), 1)
    idx = row * jnp.int32(width) + col + base        # width is a power of 2 -> shift

    # One counter-based random word per element.
    h = _fmix32(idx)

    # Disjoint bit fields: top 24 bits -> flip test (U1 < s+p), low 8 -> salt-vs-pepper.
    bits_flip = lax.shift_right_logical(h, jnp.int32(8))   # in [0, 2^24)
    bits_salt = h & jnp.int32(0xFF)                         # in [0, 256)

    mask_flip = bits_flip < jnp.int32(thr_flip24)
    mask_salt = bits_salt < jnp.int32(thr_salt8)

    x = x_ref[...]
    # Flipped pixels become exactly 0 (pepper) or 1 (salt); others pass through.
    o_ref[...] = jnp.where(mask_flip, mask_salt.astype(x.dtype), x)


def salt_pepper_noise(x, p=0.025, s=0.025, seed=0):
    """JAX/Pallas equivalent of SaltPepperNoise.forward(x)."""
    orig_shape = x.shape
    orig_dtype = x.dtype

    n = x.size
    if n == 0:
        return x

    s_f, p_f = float(s), float(p)
    proba_flip = s_f + p_f
    proba_salt = (s_f / proba_flip) if proba_flip > 0.0 else 0.0  # guard s = p = 0

    # Integer thresholds for the raw-bit compares (clamped so proba >= 1 saturates
    # to "always true" instead of wrapping).
    thr_flip24 = int(round(min(max(proba_flip, 0.0), 1.0) * (1 << 24)))
    thr_salt8 = int(round(min(max(proba_salt, 0.0), 1.0) * (1 << 8)))

    width = _LANE_WIDTH
    rows = pl.cdiv(n, width)
    rows8 = _round_up(rows, 8)               # sublane-aligned row count

    # Largest tile that (a) fits comfortably in VMEM on all generations and
    # (b) still yields a >= 2-step grid when possible (shards across v7x's 2 TCs).
    if rows8 <= 8:
        tile_rows = rows8
    else:
        tile_rows = min(_MAX_TILE_ROWS, _round_up(pl.cdiv(rows8, 2), 8))

    # Pad only up to a sublane-aligned row count (<= 8191 extra elements); row
    # counts not divisible by tile_rows are handled by Pallas partial last blocks.
    padded_n = rows8 * width
    flat = jnp.ravel(x)
    if padded_n != n:
        flat = jnp.pad(flat, (0, padded_n - n))
    x2d = flat.reshape(rows8, width)

    seed_arr = jnp.array([seed], dtype=jnp.int32)
    grid = (pl.cdiv(rows8, tile_rows),)

    kernel = functools.partial(
        _salt_pepper_kernel, thr_flip24=thr_flip24, thr_salt8=thr_salt8
    )

    out2d = pl.pallas_call(
        kernel,
        out_shape=jax.ShapeDtypeStruct((rows8, width), orig_dtype),
        grid_spec=pltpu.PrefetchScalarGridSpec(
            num_scalar_prefetch=1,                      # seed lands in SMEM
            grid=grid,
            in_specs=[pl.BlockSpec((tile_rows, width), lambda i, seed: (i, 0))],
            out_specs=pl.BlockSpec((tile_rows, width), lambda i, seed: (i, 0)),
        ),
        compiler_params=pltpu.CompilerParams(
            dimension_semantics=("parallel",),          # embarrassingly parallel tiles
            vmem_limit_bytes=32 * 1024 * 1024,
        ),
    )(seed_arr, x2d)

    y = out2d.reshape(-1)
    if padded_n != n:
        y = y[:n]
    return y.reshape(orig_shape)


if __name__ == "__main__":
    p, s = 0.025, 0.025

    # Primary shape consistent with the module's image use: NCHW.
    x = jax.random.uniform(jax.random.PRNGKey(0), (2, 4, 16, 16), dtype=jnp.float32)
    y = jax.block_until_ready(salt_pepper_noise(x, p=p, s=s, seed=0))

    # Semantic sanity checks (RNG stream differs from torch, so no bitwise ref):
    # shape/dtype preserved, unflipped pixels equal x, flipped pixels are exactly 0 or 1,
    # and the flip fraction is near p + s = 0.05.
    assert y.shape == x.shape and y.dtype == x.dtype
    flipped = y != x
    assert bool(jnp.all(jnp.where(flipped, (y == 0.0) | (y == 1.0), True)))
    frac = float(jnp.mean(flipped.astype(jnp.float32)))
    assert 0.0 < frac < 0.25, f"unexpected flip fraction {frac}"

    # Secondary shape exercising the multi-step grid and the partial last row-block path
    # (24 rows of 1024 -> tile_rows=16, grid=2, last block half-valid).
    x2 = jax.random.uniform(jax.random.PRNGKey(1), (2, 3, 64, 64), dtype=jnp.float32)
    y2 = jax.block_until_ready(salt_pepper_noise(x2, p=p, s=s, seed=7))
    assert y2.shape == x2.shape and y2.dtype == x2.dtype
    flipped2 = y2 != x2
    assert bool(jnp.all(jnp.where(flipped2, (y2 == 0.0) | (y2 == 1.0), True)))
    frac2 = float(jnp.mean(flipped2.astype(jnp.float32)))
    assert 0.01 < frac2 < 0.12, f"unexpected flip fraction {frac2}"

    print("KERNEL_OK")
</pallas_src>

<mosaic_0001>
module attributes {stable_mosaic.version = 11 : i64} {
  func.func @_salt_pepper_kernel(%arg0: i32, %arg1: memref<1xi32, #tpu.memory_space<smem>>, %arg2: memref<8x1024xf32, #tpu.memory_space<vmem>>, %arg3: memref<8x1024xf32, #tpu.memory_space<vmem>>) attributes {dimension_semantics = [#tpu.dimension_semantics<parallel>], iteration_bounds = array<i64: 1>, scalar_prefetch = 1 : i64, scratch_operands = 0 : i64, tpu.core_type = #tpu.core_type<tc>, window_params = [{transform_indices = @transform_0, window_bounds = array<i64: 8, 1024>}, {transform_indices = @transform_1, window_bounds = array<i64: 8, 1024>}]} {
    %c8192_i32 = arith.constant 8192 : i32
    %0 = arith.muli %arg0, %c8192_i32 : i32
    %c0 = arith.constant 0 : index
    %1 = memref.load %arg1[%c0] : memref<1xi32, #tpu.memory_space<smem>>
    %c-1640531527_i32 = arith.constant -1640531527 : i32
    %2 = arith.muli %1, %c-1640531527_i32 : i32
    %3 = arith.addi %0, %2 : i32
    %4 = tpu.iota {dimensions = array<i32: 0>} : vector<8x1024xi32>
    %5 = tpu.iota {dimensions = array<i32: 1>} : vector<8x1024xi32>
    %c1024_i32 = arith.constant 1024 : i32
    %6 = vector.broadcast %c1024_i32 : i32 to vector<8x1024xi32>
    %7 = arith.muli %4, %6 : vector<8x1024xi32>
    %8 = arith.addi %7, %5 : vector<8x1024xi32>
    %9 = vector.broadcast %3 : i32 to vector<8x1024xi32>
    %10 = arith.addi %8, %9 : vector<8x1024xi32>
    %c16_i32 = arith.constant 16 : i32
    %11 = vector.broadcast %c16_i32 : i32 to vector<8x1024xi32>
    %12 = arith.shrui %10, %11 : vector<8x1024xi32>
    %13 = arith.xori %10, %12 : vector<8x1024xi32>
    %c-2048144789_i32 = arith.constant -2048144789 : i32
    %14 = vector.broadcast %c-2048144789_i32 : i32 to vector<8x1024xi32>
    %15 = arith.muli %13, %14 : vector<8x1024xi32>
    %c13_i32 = arith.constant 13 : i32
    %16 = vector.broadcast %c13_i32 : i32 to vector<8x1024xi32>
    %17 = arith.shrui %15, %16 : vector<8x1024xi32>
    %18 = arith.xori %15, %17 : vector<8x1024xi32>
    %c-1028477387_i32 = arith.constant -1028477387 : i32
    %19 = vector.broadcast %c-1028477387_i32 : i32 to vector<8x1024xi32>
    %20 = arith.muli %18, %19 : vector<8x1024xi32>
    %c16_i32_0 = arith.constant 16 : i32
    %21 = vector.broadcast %c16_i32_0 : i32 to vector<8x1024xi32>
    %22 = arith.shrui %20, %21 : vector<8x1024xi32>
    %23 = arith.xori %20, %22 : vector<8x1024xi32>
    %c8_i32 = arith.constant 8 : i32
    %24 = vector.broadcast %c8_i32 : i32 to vector<8x1024xi32>
    %25 = arith.shrui %23, %24 : vector<8x1024xi32>
    %c255_i32 = arith.constant 255 : i32
    %26 = vector.broadcast %c255_i32 : i32 to vector<8x1024xi32>
    %27 = arith.andi %23, %26 : vector<8x1024xi32>
    %c838861_i32 = arith.constant 838861 : i32
    %28 = vector.broadcast %c838861_i32 : i32 to vector<8x1024xi32>
    %29 = arith.cmpi slt, %25, %28 : vector<8x1024xi32>
    %c128_i32 = arith.constant 128 : i32
    %30 = vector.broadcast %c128_i32 : i32 to vector<8x1024xi32>
    %31 = arith.cmpi slt, %27, %30 : vector<8x1024xi32>
    %c0_1 = arith.constant 0 : index
    %c0_2 = arith.constant 0 : index
    %32 = vector.load %arg2[%c0_1, %c0_2] : memref<8x1024xf32, #tpu.memory_space<vmem>>, vector<8x1024xf32>
    %33 = arith.extui %31 : vector<8x1024xi1> to vector<8x1024xi32>
    %34 = arith.sitofp %33 : vector<8x1024xi32> to vector<8x1024xf32>
    %35 = arith.select %29, %34, %32 : vector<8x1024xi1>, vector<8x1024xf32>
    %c0_3 = arith.constant 0 : index
    %c0_4 = arith.constant 0 : index
    %36 = vector.load %arg3[%c0_3, %c0_4] : memref<8x1024xf32, #tpu.memory_space<vmem>>, vector<8x1024xf32>
    tpu.vector_store %arg3[%c0_3, %c0_4], %35 {strides = array<i32>} : memref<8x1024xf32, #tpu.memory_space<vmem>>, vector<8x1024xf32>,
    return
  }
  func.func @transform_0(%arg0: i32, %arg1: memref<1xi32, #tpu.memory_space<smem>>) -> (i32, i32) {
    %c0_i32 = arith.constant 0 : i32
    %c0_i32_0 = arith.constant 0 : i32
    return %arg0, %c0_i32 : i32, i32
  }
  func.func @transform_1(%arg0: i32, %arg1: memref<1xi32, #tpu.memory_space<smem>>) -> (i32, i32) {
    %c0_i32 = arith.constant 0 : i32
    %c0_i32_0 = arith.constant 0 : i32
    return %arg0, %c0_i32 : i32, i32
  }
}

</mosaic_0001>

<llo_original>
// kernel: tpu_custom_call.1
$region0: #{tpu_custom_call.1}
  #allocation0 [shape = 'u32[]', space=smem, size = 0x4, offset = 0x4, fixed_abs, tag = 'smem constant byte address 0x4 - core index']
  #allocation1 [shape = 'u32[72,128]{1,0:T(1,128)}', space=vmem, size = 0x9000, scoped, tag = 'internal scratch']
  #allocation2 [shape = 's32[1]{0}', space=sflag, size = 0x4, scoped, tag = 'scoped memory for tpu_custom_call.1']
  #allocation3 [shape = 's32[1]{0:T(128)S(6)}', space=smem, size = 0x200, scoped, tag = 'prefetched SMEM operand 0']
  %s0 = inlined_call_operand.<no memory space> [shape: s32[1], index: 0, kind: input, shape index: {}]
  %s1 = inlined_call_operand.hbm [shape: f32[8,1024], index: 1, kind: input, shape index: {}]
  %s2 = inlined_call_operand.hbm [shape: f32[8,1024], index: 2, kind: output, shape index: {}]
  %s3 = sld [smem:[#allocation0]]
  $region18: #{tpu_custom_call.1} parent=0
    _
  %s5 = ssub.s32 1, %s3
  %s6 = scalar_select 0, %s5, %s3
  %7 = sst [smem:[#allocation3]] %s0
  $region1: #{tpu_custom_call.1} parent=0
    #allocation4 [shape = 'u8[32768]{0}', space=vmem, size = 0x8000, scoped, tag = 'input window, operand 1, single buffered']
    #allocation5 [shape = 's32[1]{0}', space=sflag, size = 0x4, scoped, tag = 'scoped memory for tpu_custom_call.1']
    #allocation6 [shape = 's32[1]{0}', space=sflag, size = 0x4, scoped, tag = 'scoped memory for tpu_custom_call.1']
    #allocation7 [shape = 'u8[32768]{0}', space=vmem, size = 0x8000, scoped, tag = 'output window, operand 0, single buffered']
    %8 = vsyncpa [#allocation5], 0
    %9 = vsyncpa [#allocation6], 0
    // Predicated region
    $region2: #{tpu_custom_call.1} parent=1 // pred_check
      _
    $region3: #{tpu_custom_call.1} parent=1 // pred_check_branch
      %11 = sbr.rel (0) target = $region5
    $region4: #{tpu_custom_call.1} parent=1 // pred_region
      %13 = vsyncadd [#allocation5], 0
      %s15 = sshll.u32 %s1, 4
      %s16 = int_to_ptr.hbm [resolvable:$true] %s15
      %s17 = sshll.u32 [#allocation4], 4
      %s18 = int_to_ptr.vmem [resolvable:$true] %s17
      %20 = dma.hbm_to_vmem [thread:$0]  %s16, 1024, %s18, [#allocation5]
    $region5: #{tpu_custom_call.1} parent=1 // pred_fallthru
      _
    // Predicated region
    $region6: #{tpu_custom_call.1} parent=1 // pred_check
      _
    $region7: #{tpu_custom_call.1} parent=1 // pred_check_branch
      %22 = sbr.rel (0) target = $region9
    $region8: #{tpu_custom_call.1} parent=1 // pred_region
      %24 = dma.done [#allocation5], 1024
    $region9: #{tpu_custom_call.1} parent=1 // pred_fallthru
      _
    %s25 = smul.u32 0, 8192
    %s26 = sld [smem:[#allocation3]]
    %s27 = smul.u32 %s26, 2654435769
    %s28 = sadd.s32 %s25, %s27
    %v29 = vlaneseq
    %v30 = vshrl.u32 %v29, 7
    %v31 = vlaneseq
    %v32 = vand.u32 %v31, 127
    %v33 = vadd.s32 %v32, 128
    %v34 = vadd.s32 %v32, 256
    %v35 = vadd.s32 %v32, 384
    %v36 = vadd.s32 %v32, 512
    %v37 = vadd.s32 %v32, 640
    %v38 = vadd.s32 %v32, 768
    %v39 = vadd.s32 %v32, 896
    %v40 = vmul.u32 %v30, 1024
    %v41 = vadd.s32 %v40, %v32
    %v42 = vadd.s32 %v40, %v33
    %v43 = vadd.s32 %v40, %v34
    %v44 = vadd.s32 %v40, %v35
    %v45 = vadd.s32 %v40, %v36
    %v46 = vadd.s32 %v40, %v37
    %v47 = vadd.s32 %v40, %v38
    %v48 = vadd.s32 %v40, %v39
    %v49 = vstv %s28
    %v50 = vadd.s32 %v41, %v49
    %v51 = vadd.s32 %v42, %v49
    %v52 = vadd.s32 %v43, %v49
    %v53 = vadd.s32 %v44, %v49
    %v54 = vadd.s32 %v45, %v49
    %v55 = vadd.s32 %v46, %v49
    %v56 = vadd.s32 %v47, %v49
    %v57 = vadd.s32 %v48, %v49
    %v58 = vshrl.u32 %v50, 16
    %v59 = vshrl.u32 %v51, 16
    %v60 = vshrl.u32 %v52, 16
    %v61 = vshrl.u32 %v53, 16
    %v62 = vshrl.u32 %v54, 16
    %v63 = vshrl.u32 %v55, 16
    %v64 = vshrl.u32 %v56, 16
    %v65 = vshrl.u32 %v57, 16
    %v66 = vxor.u32 %v50, %v58
    %v67 = vxor.u32 %v51, %v59
    %v68 = vxor.u32 %v52, %v60
    %v69 = vxor.u32 %v53, %v61
    %v70 = vxor.u32 %v54, %v62
    %v71 = vxor.u32 %v55, %v63
    %v72 = vxor.u32 %v56, %v64
    %v73 = vxor.u32 %v57, %v65
    %v74 = vmul.u32 %v66, 2246822507
    %v75 = vmul.u32 %v67, 2246822507
    %v76 = vmul.u32 %v68, 2246822507
    %v77 = vmul.u32 %v69, 2246822507
    %v78 = vmul.u32 %v70, 2246822507
    %v79 = vmul.u32 %v71, 2246822507
    %v80 = vmul.u32 %v72, 2246822507
    %v81 = vmul.u32 %v73, 2246822507
    %v82 = vshrl.u32 %v74, 13
    %v83 = vshrl.u32 %v75, 13
    %v84 = vshrl.u32 %v76, 13
    %v85 = vshrl.u32 %v77, 13
    %v86 = vshrl.u32 %v78, 13
    %v87 = vshrl.u32 %v79, 13
    %v88 = vshrl.u32 %v80, 13
    %v89 = vshrl.u32 %v81, 13
    %v90 = vxor.u32 %v74, %v82
    %v91 = vxor.u32 %v75, %v83
    %v92 = vxor.u32 %v76, %v84
    %v93 = vxor.u32 %v77, %v85
    %v94 = vxor.u32 %v78, %v86
    %v95 = vxor.u32 %v79, %v87
    %v96 = vxor.u32 %v80, %v88
    %v97 = vxor.u32 %v81, %v89
    %v98 = vmul.u32 %v90, 3266489909
    %v99 = vmul.u32 %v91, 3266489909
    %v100 = vmul.u32 %v92, 3266489909
    %v101 = vmul.u32 %v93, 3266489909
    %v102 = vmul.u32 %v94, 3266489909
    %v103 = vmul.u32 %v95, 3266489909
    %v104 = vmul.u32 %v96, 3266489909
    %v105 = vmul.u32 %v97, 3266489909
    %v106 = vshrl.u32 %v98, 16
    %v107 = vshrl.u32 %v99, 16
    %v108 = vshrl.u32 %v100, 16
    %v109 = vshrl.u32 %v101, 16
    %v110 = vshrl.u32 %v102, 16
    %v111 = vshrl.u32 %v103, 16
    %v112 = vshrl.u32 %v104, 16
    %v113 = vshrl.u32 %v105, 16
    %v114 = vxor.u32 %v98, %v106
    %v115 = vxor.u32 %v99, %v107
    %v116 = vxor.u32 %v100, %v108
    %v117 = vxor.u32 %v101, %v109
    %v118 = vxor.u32 %v102, %v110
    %v119 = vxor.u32 %v103, %v111
    %v120 = vxor.u32 %v104, %v112
    %v121 = vxor.u32 %v105, %v113
    %v122 = vshrl.u32 %v114, 8
    %v123 = vshrl.u32 %v115, 8
    %v124 = vshrl.u32 %v116, 8
    %v125 = vshrl.u32 %v117, 8
    %v126 = vshrl.u32 %v118, 8
    %v127 = vshrl.u32 %v119, 8
    %v128 = vshrl.u32 %v120, 8
    %v129 = vshrl.u32 %v121, 8
    %v130 = vand.u32 %v114, 255
    %v131 = vand.u32 %v115, 255
    %v132 = vand.u32 %v116, 255
    %v133 = vand.u32 %v117, 255
    %v134 = vand.u32 %v118, 255
    %v135 = vand.u32 %v119, 255
    %v136 = vand.u32 %v120, 255
    %v137 = vand.u32 %v121, 255
    %vm138 = vcmp.lt.s32.totalorder %v122, 838861
    %vm139 = vcmp.lt.s32.totalorder %v123, 838861
    %vm140 = vcmp.lt.s32.totalorder %v124, 838861
    %vm141 = vcmp.lt.s32.totalorder %v125, 838861
    %vm142 = vcmp.lt.s32.totalorder %v126, 838861
    %vm143 = vcmp.lt.s32.totalorder %v127, 838861
    %vm144 = vcmp.lt.s32.totalorder %v128, 838861
    %vm145 = vcmp.lt.s32.totalorder %v129, 838861
    %vm146 = vcmp.lt.s32.totalorder %v130, 128
    %vm147 = vcmp.lt.s32.totalorder %v131, 128
    %vm148 = vcmp.lt.s32.totalorder %v132, 128
    %vm149 = vcmp.lt.s32.totalorder %v133, 128
    %vm150 = vcmp.lt.s32.totalorder %v134, 128
    %vm151 = vcmp.lt.s32.totalorder %v135, 128
    %vm152 = vcmp.lt.s32.totalorder %v136, 128
    %vm153 = vcmp.lt.s32.totalorder %v137, 128
    %v154 = vld [vmem:[#allocation4] sm:$0xff]
    %v155 = vld [vmem:[#allocation4 + $0x8] sm:$0xff]
    %v156 = vld [vmem:[#allocation4 + $0x10] sm:$0xff]
    %v157 = vld [vmem:[#allocation4 + $0x18] sm:$0xff]
    %v158 = vld [vmem:[#allocation4 + $0x20] sm:$0xff]
    %v159 = vld [vmem:[#allocation4 + $0x28] sm:$0xff]
    %v160 = vld [vmem:[#allocation4 + $0x30] sm:$0xff]
    %v161 = vld [vmem:[#allocation4 + $0x38] sm:$0xff]
    %v162 = vsel %vm146, 1, 0
    %v163 = vsel %vm147, 1, 0
    %v164 = vsel %vm148, 1, 0
    %v165 = vsel %vm149, 1, 0
    %v166 = vsel %vm150, 1, 0
    %v167 = vsel %vm151, 1, 0
    %v168 = vsel %vm152, 1, 0
    %v169 = vsel %vm153, 1, 0
    %v170 = vcvt.s32.f32 %v162
    %v171 = vcvt.s32.f32 %v163
    %v172 = vcvt.s32.f32 %v164
    %v173 = vcvt.s32.f32 %v165
    %v174 = vcvt.s32.f32 %v166
    %v175 = vcvt.s32.f32 %v167
    %v176 = vcvt.s32.f32 %v168
    %v177 = vcvt.s32.f32 %v169
    %v178 = vsel %vm138, %v170, %v154
    %v179 = vsel %vm139, %v171, %v155
    %v180 = vsel %vm140, %v172, %v156
    %v181 = vsel %vm141, %v173, %v157
    %v182 = vsel %vm142, %v174, %v158
    %v183 = vsel %vm143, %v175, %v159
    %v184 = vsel %vm144, %v176, %v160
    %v185 = vsel %vm145, %v177, %v161
    %186 = vst [vmem:[#allocation7] sm:$0xff] %v178
    %187 = vst [vmem:[#allocation7 + $0x8] sm:$0xff] %v179
    %188 = vst [vmem:[#allocation7 + $0x10] sm:$0xff] %v180
    %189 = vst [vmem:[#allocation7 + $0x18] sm:$0xff] %v181
    %190 = vst [vmem:[#allocation7 + $0x20] sm:$0xff] %v182
    %191 = vst [vmem:[#allocation7 + $0x28] sm:$0xff] %v183
    %192 = vst [vmem:[#allocation7 + $0x30] sm:$0xff] %v184
    %193 = vst [vmem:[#allocation7 + $0x38] sm:$0xff] %v185
    // Predicated region
    $region10: #{tpu_custom_call.1} parent=1 // pred_check
      _
    $region11: #{tpu_custom_call.1} parent=1 // pred_check_branch
      %195 = sbr.rel (0) target = $region13
    $region12: #{tpu_custom_call.1} parent=1 // pred_region
      %197 = vsyncadd [#allocation6], 0
      %s199 = sshll.u32 [#allocation7], 4
      %s200 = int_to_ptr.vmem [resolvable:$true] %s199
      %s201 = sshll.u32 %s2, 4
      %s202 = int_to_ptr.hbm [resolvable:$true] %s201
      %204 = dma.vmem_to_hbm [thread:$0]  %s200, 1024, %s202, [#allocation6]
    $region13: #{tpu_custom_call.1} parent=1 // pred_fallthru
      _
    // Predicated region
    $region14: #{tpu_custom_call.1} parent=1 // pred_check
      _
    $region15: #{tpu_custom_call.1} parent=1 // pred_check_branch
      %206 = sbr.rel (0) target = $region17
    $region16: #{tpu_custom_call.1} parent=1 // pred_region
      %208 = dma.done [#allocation6], 1024
    $region17: #{tpu_custom_call.1} parent=1 // pred_fallthru
      _
    %209 = vsyncpa [#allocation5], 1
    %210 = vsyncpa [#allocation6], 1

</llo_original>
